<compile_context>
chip_gen: v5e
topology: v5e:2x2
jax: 0.10.0
libtpu: 0.0.40
codegen_flags: <defaults>
</compile_context>

<pallas_src>
import functools

import jax
import jax.numpy as jnp
from jax.experimental import pallas as pl
from jax.experimental.pallas import tpu as pltpu

_LANE = 128      # vreg lane width
_SUBLANE = 8     # vreg sublane count (f32)


def _cdiv(a, b):
    return (a + b - 1) // b


def _round_up(n, m):
    return ((n + m - 1) // m) * m


def _vmem_capacity_bytes():
    """Physical VMEM of the attached TPU (fallback: v7x's 64 MiB per TC)."""
    try:
        return int(pltpu.get_tpu_info().vmem_capacity_bytes)
    except Exception:
        return 64 << 20


def _resident_spec(block_shape, index_map):
    """BlockSpec for a grid-invariant operand: single VMEM buffer."""
    try:
        return pl.BlockSpec(block_shape, index_map, pipeline_mode=pl.Buffered(1))
    except TypeError:  # older BlockSpec signature without pipeline_mode
        return pl.BlockSpec(block_shape, index_map)


def _choose_batch_tiling(B, tb_max, min_steps):
    """Pick (TB, B_pad): TB multiple of 8, overshoot bounded to ~one sublane
    row per tile, and >= min_steps grid steps whenever the batch allows it."""
    tb_max = max(_SUBLANE, (tb_max // _SUBLANE) * _SUBLANE)
    B8 = _round_up(B, _SUBLANE)
    n = max(_cdiv(B8, tb_max), 1)
    if B8 >= min_steps * _SUBLANE:
        n = max(n, min_steps)
    TB = _round_up(_cdiv(B8, n), _SUBLANE)
    n = _cdiv(B8, TB)
    return TB, n * TB


def generator_kernel(x_ref, w1_ref, b1_ref, w2_ref, b2_ref, o_ref, *, mxu_dtype):
    # ---- layer 1: Linear + ReLU ------------------------------------------
    w1 = w1_ref[...]
    dt1 = mxu_dtype if mxu_dtype is not None else w1.dtype
    h = jnp.dot(x_ref[...].astype(dt1), w1.astype(dt1),
                preferred_element_type=jnp.float32)
    h = jnp.maximum(h + b1_ref[...].astype(jnp.float32), 0.0)

    # ---- layer 2: Linear + ReLU ------------------------------------------
    w2 = w2_ref[...]
    dt2 = mxu_dtype if mxu_dtype is not None else w2.dtype
    y = jnp.dot(h.astype(dt2), w2.astype(dt2),
                preferred_element_type=jnp.float32)
    y = jnp.maximum(y + b2_ref[...].astype(jnp.float32), 0.0)

    o_ref[...] = y.astype(o_ref.dtype)


def generator_forward(x, w1, b1, w2, b2, *, tb_max=1024, out_dtype=None,
                      mxu_dtype=None, min_grid_steps=2):
    """ReLU(ReLU(x @ w1 + b1) @ w2 + b2).

    x       : [B, L] activations
    w1, w2  : [L, L] weights, stored pre-transposed (in x out)
    b1, b2  : [L] or [1, L] biases
    mxu_dtype : optional dtype both dot operands are cast to (e.g. bf16);
                accumulation is always f32.
    """
    B, L = x.shape
    out_dtype = jnp.dtype(out_dtype or x.dtype)
    mxu_dt = jnp.dtype(mxu_dtype) if mxu_dtype is not None else None
    b1 = jnp.reshape(b1, (1, -1))
    b2 = jnp.reshape(b2, (1, -1))

    # --- lane padding policy: pad L only when it is large and the remainder
    # is small; otherwise full-width (full-dim) blocks avoid extra HBM traffic.
    rem = (-L) % _LANE
    if rem == 0 or L < _LANE or rem > max(L // 8, 1):
        L_pad = L
    else:
        L_pad = L + rem

    # --- batch tiling (TB multiple of 8, bounded overshoot, >=2 grid steps).
    TB, B_pad = _choose_batch_tiling(B, tb_max, min_grid_steps)

    if L_pad != L:
        x = jnp.pad(x, ((0, 0), (0, L_pad - L)))
        w1 = jnp.pad(w1, ((0, L_pad - L), (0, L_pad - L)))
        w2 = jnp.pad(w2, ((0, L_pad - L), (0, L_pad - L)))
        b1 = jnp.pad(b1, ((0, 0), (0, L_pad - L)))
        b2 = jnp.pad(b2, ((0, 0), (0, L_pad - L)))
    if B_pad != B:
        x = jnp.pad(x, ((0, B_pad - B), (0, 0)))

    grid = (B_pad // TB,)

    # --- VMEM budget: double-buffered activation tiles, single-buffered
    # resident weights/biases, f32 intermediates, and MXU-cast temporaries.
    x_b = jnp.dtype(x.dtype).itemsize
    o_b = out_dtype.itemsize
    w_b = jnp.dtype(w1.dtype).itemsize
    m_b = mxu_dt.itemsize if mxu_dt is not None else w_b
    act = TB * L_pad
    need = (2 * act * x_b            # double-buffered x tiles
            + 2 * act * o_b          # double-buffered out tiles
            + 2 * L_pad * L_pad * w_b  # w1, w2 (single-buffered, resident)
            + 2 * L_pad * w_b          # b1, b2
            + act * 4                  # h (f32 intermediate)
            + act * 4                  # y (f32 before store cast)
            + 2 * act * m_b            # MXU-dtype copies of x and h
            + (2 << 20))               # compiler scratch headroom

    cap = _vmem_capacity_bytes()
    if need > int(0.9 * cap):
        # TODO(synk): stream W1/W2 over a K grid axis with an f32 VMEM
        # accumulator (reduction axis last, "arbitrary") when resident
        # weights exceed per-TC VMEM (matters earliest on v7x's 64 MiB).
        raise NotImplementedError(
            f"Resident-weight path needs ~{need >> 20} MiB VMEM but only "
            f"~{cap >> 20} MiB is available; weight streaming not implemented.")
    vmem_limit = int(min(max(need, 16 << 20), int(0.85 * cap)))

    kernel = functools.partial(generator_kernel, mxu_dtype=mxu_dt)

    out = pl.pallas_call(
        kernel,
        out_shape=jax.ShapeDtypeStruct((B_pad, L_pad), out_dtype),
        grid_spec=pltpu.PrefetchScalarGridSpec(
            num_scalar_prefetch=0,
            grid=grid,
            in_specs=[
                pl.BlockSpec((TB, L_pad), lambda i: (i, 0)),        # x: batch-tiled
                _resident_spec((L_pad, L_pad), lambda i: (0, 0)),   # w1: resident
                _resident_spec((1, L_pad), lambda i: (0, 0)),       # b1
                _resident_spec((L_pad, L_pad), lambda i: (0, 0)),   # w2: resident
                _resident_spec((1, L_pad), lambda i: (0, 0)),       # b2
            ],
            out_specs=pl.BlockSpec((TB, L_pad), lambda i: (i, 0)),
        ),
        compiler_params=pltpu.CompilerParams(
            # Batch tiles are independent: "parallel" lets v7x shard the grid
            # across its 2 TensorCores; harmless on single-TC v5e/v6e.
            dimension_semantics=("parallel",),
            vmem_limit_bytes=vmem_limit,
        ),
    )(x, w1, b1, w2, b2)

    if B_pad == B and L_pad == L:
        return out                      # zero extra HBM passes
    return out[:B, :L]


def make_generator_params(latent_size, dtype=jnp.float32):
    # nn.init.eye_(weight): identity weight; bias filled with 1e-5.
    # PyTorch Linear computes x @ W.T + b; we store W.T (identity is symmetric).
    w = jnp.eye(latent_size, dtype=dtype)
    b = jnp.full((1, latent_size), 1e-5, dtype=dtype)
    return w, b, w, b


def _reference(x, w1, b1, w2, b2):
    h = jnp.maximum(x @ w1.astype(jnp.float32) + b1.astype(jnp.float32), 0.0)
    return jnp.maximum(h @ w2.astype(jnp.float32) + b2.astype(jnp.float32), 0.0)


if __name__ == "__main__":
    latent_size = 32
    key = jax.random.PRNGKey(0)

    # ---- f32 weights, batch=8 (single tile): exact check vs pure-JAX ref ---
    batch = 8
    x = jax.random.normal(key, (batch, latent_size), dtype=jnp.float32)
    w1, b1, w2, b2 = make_generator_params(latent_size, dtype=jnp.float32)
    out = jax.block_until_ready(generator_forward(x, w1, b1, w2, b2))
    ref = _reference(x, w1, b1, w2, b2)
    assert out.shape == (batch, latent_size)
    assert jnp.allclose(out, ref, atol=1e-6), "f32 mismatch vs reference"

    # ---- ragged batch (52 -> padded, multi-tile grid, exercises pipelining) --
    batch2 = 52
    x2 = jax.random.normal(jax.random.PRNGKey(1), (batch2, latent_size),
                           dtype=jnp.float32)
    out2 = jax.block_until_ready(generator_forward(x2, w1, b1, w2, b2, tb_max=32))
    ref2 = _reference(x2, w1, b1, w2, b2)
    assert out2.shape == (batch2, latent_size)
    assert jnp.allclose(out2, ref2, atol=1e-6), "ragged-batch mismatch"

    # ---- bf16 weights (halved weight DMA, bf16 MXU path), f32 accumulation --
    w1b, b1b, w2b, b2b = (w1.astype(jnp.bfloat16), b1.astype(jnp.bfloat16),
                          w2.astype(jnp.bfloat16), b2.astype(jnp.bfloat16))
    out_bf = jax.block_until_ready(
        generator_forward(x, w1b, b1b, w2b, b2b, out_dtype=jnp.float32))
    assert jnp.allclose(out_bf, ref, atol=2e-2, rtol=2e-2), "bf16 weight mismatch"

    # ---- f32 weights with mxu_dtype=bf16 (bf16-native MXU on v6e/v7x) -------
    out_mx = jax.block_until_ready(
        generator_forward(x, w1, b1, w2, b2, mxu_dtype=jnp.bfloat16))
    assert jnp.allclose(out_mx, ref, atol=2e-2, rtol=2e-2), "mxu_dtype mismatch"

    print("KERNEL_OK")
</pallas_src>

<mosaic_0001>
module attributes {stable_mosaic.version = 11 : i64} {
  func.func @generator_kernel(%arg0: i32, %arg1: memref<8x32xf32, #tpu.memory_space<vmem>>, %arg2: memref<32x32xf32, #tpu.memory_space<vmem>>, %arg3: memref<1x32xf32, #tpu.memory_space<vmem>>, %arg4: memref<32x32xf32, #tpu.memory_space<vmem>>, %arg5: memref<1x32xf32, #tpu.memory_space<vmem>>, %arg6: memref<8x32xf32, #tpu.memory_space<vmem>>) attributes {dimension_semantics = [#tpu.dimension_semantics<parallel>], iteration_bounds = array<i64: 1>, scalar_prefetch = 0 : i64, scratch_operands = 0 : i64, tpu.core_type = #tpu.core_type<tc>, window_params = [{transform_indices = @transform_0, window_bounds = array<i64: 8, 32>}, {pipeline_mode = #tpu.pipeline_mode<synchronous>, transform_indices = @transform_1, window_bounds = array<i64: 32, 32>}, {pipeline_mode = #tpu.pipeline_mode<synchronous>, transform_indices = @transform_2, window_bounds = array<i64: 1, 32>}, {pipeline_mode = #tpu.pipeline_mode<synchronous>, transform_indices = @transform_3, window_bounds = array<i64: 32, 32>}, {pipeline_mode = #tpu.pipeline_mode<synchronous>, transform_indices = @transform_4, window_bounds = array<i64: 1, 32>}, {transform_indices = @transform_5, window_bounds = array<i64: 8, 32>}]} {
    %c0 = arith.constant 0 : index
    %c0_0 = arith.constant 0 : index
    %0 = vector.load %arg2[%c0, %c0_0] : memref<32x32xf32, #tpu.memory_space<vmem>>, vector<32x32xf32>
    %c0_1 = arith.constant 0 : index
    %c0_2 = arith.constant 0 : index
    %1 = vector.load %arg1[%c0_1, %c0_2] : memref<8x32xf32, #tpu.memory_space<vmem>>, vector<8x32xf32>
    %cst = arith.constant dense<0.000000e+00> : vector<8x32xf32>
    %2 = tpu.matmul %1, %0, %cst {dimension_numbers = #tpu.dot_dimension_numbers<[1], [0], [0], [1], [0, 0, 1, 1], [], []>} : vector<8x32xf32>, vector<32x32xf32>, vector<8x32xf32> -> vector<8x32xf32>
    %c0_3 = arith.constant 0 : index
    %c0_4 = arith.constant 0 : index
    %3 = vector.load %arg3[%c0_3, %c0_4] : memref<1x32xf32, #tpu.memory_space<vmem>>, vector<1x32xf32>
    %4 = vector.broadcast %3 : vector<1x32xf32> to vector<8x32xf32>
    %5 = arith.addf %2, %4 : vector<8x32xf32>
    %cst_5 = arith.constant 0.000000e+00 : f32
    %6 = vector.broadcast %cst_5 : f32 to vector<8x32xf32>
    %7 = arith.maximumf %5, %6 : vector<8x32xf32>
    %c0_6 = arith.constant 0 : index
    %c0_7 = arith.constant 0 : index
    %8 = vector.load %arg4[%c0_6, %c0_7] : memref<32x32xf32, #tpu.memory_space<vmem>>, vector<32x32xf32>
    %cst_8 = arith.constant dense<0.000000e+00> : vector<8x32xf32>
    %9 = tpu.matmul %7, %8, %cst_8 {dimension_numbers = #tpu.dot_dimension_numbers<[1], [0], [0], [1], [0, 0, 1, 1], [], []>} : vector<8x32xf32>, vector<32x32xf32>, vector<8x32xf32> -> vector<8x32xf32>
    %c0_9 = arith.constant 0 : index
    %c0_10 = arith.constant 0 : index
    %10 = vector.load %arg5[%c0_9, %c0_10] : memref<1x32xf32, #tpu.memory_space<vmem>>, vector<1x32xf32>
    %11 = vector.broadcast %10 : vector<1x32xf32> to vector<8x32xf32>
    %12 = arith.addf %9, %11 : vector<8x32xf32>
    %cst_11 = arith.constant 0.000000e+00 : f32
    %13 = vector.broadcast %cst_11 : f32 to vector<8x32xf32>
    %14 = arith.maximumf %12, %13 : vector<8x32xf32>
    %c0_12 = arith.constant 0 : index
    %c0_13 = arith.constant 0 : index
    %15 = vector.load %arg6[%c0_12, %c0_13] : memref<8x32xf32, #tpu.memory_space<vmem>>, vector<8x32xf32>
    tpu.vector_store %arg6[%c0_12, %c0_13], %14 {strides = array<i32>} : memref<8x32xf32, #tpu.memory_space<vmem>>, vector<8x32xf32>,
    return
  }
  func.func @transform_0(%arg0: i32) -> (i32, i32) {
    %c0_i32 = arith.constant 0 : i32
    %c0_i32_0 = arith.constant 0 : i32
    return %arg0, %c0_i32 : i32, i32
  }
  func.func @transform_1(%arg0: i32) -> (i32, i32) {
    %c0_i32 = arith.constant 0 : i32
    %c0_i32_0 = arith.constant 0 : i32
    %c0_i32_1 = arith.constant 0 : i32
    return %c0_i32, %c0_i32_0 : i32, i32
  }
  func.func @transform_2(%arg0: i32) -> (i32, i32) {
    %c0_i32 = arith.constant 0 : i32
    %c0_i32_0 = arith.constant 0 : i32
    %c0_i32_1 = arith.constant 0 : i32
    return %c0_i32, %c0_i32_0 : i32, i32
  }
  func.func @transform_3(%arg0: i32) -> (i32, i32) {
    %c0_i32 = arith.constant 0 : i32
    %c0_i32_0 = arith.constant 0 : i32
    %c0_i32_1 = arith.constant 0 : i32
    return %c0_i32, %c0_i32_0 : i32, i32
  }
  func.func @transform_4(%arg0: i32) -> (i32, i32) {
    %c0_i32 = arith.constant 0 : i32
    %c0_i32_0 = arith.constant 0 : i32
    %c0_i32_1 = arith.constant 0 : i32
    return %c0_i32, %c0_i32_0 : i32, i32
  }
  func.func @transform_5(%arg0: i32) -> (i32, i32) {
    %c0_i32 = arith.constant 0 : i32
    %c0_i32_0 = arith.constant 0 : i32
    return %arg0, %c0_i32 : i32, i32
  }
}

</mosaic_0001>

<llo_original>
// kernel: tpu_custom_call.1
$region0: #{tpu_custom_call.1}
  #allocation0 [shape = 'u32[]', space=smem, size = 0x4, offset = 0x4, fixed_abs, tag = 'smem constant byte address 0x4 - core index']
  #allocation1 [shape = 'u32[72,128]{1,0:T(1,128)}', space=vmem, size = 0x9000, scoped, tag = 'internal scratch']
  %s0 = inlined_call_operand.hbm [shape: f32[8,32], index: 0, kind: input, shape index: {}]
  %s1 = inlined_call_operand.hbm [shape: f32[32,32], index: 1, kind: input, shape index: {}]
  %s2 = inlined_call_operand.vmem [shape: f32[1,32], index: 2, kind: input, shape index: {}]
  %s3 = inlined_call_operand.hbm [shape: f32[32,32], index: 3, kind: input, shape index: {}]
  %s4 = inlined_call_operand.vmem [shape: f32[1,32], index: 4, kind: input, shape index: {}]
  %s5 = inlined_call_operand.hbm [shape: f32[8,32], index: 5, kind: output, shape index: {}]
  %s6 = sld [smem:[#allocation0]]
  $region42: #{tpu_custom_call.1} parent=0
    _
  %s8 = ssub.s32 1, %s6
  %s9 = scalar_select 0, %s8, %s6
  $region1: #{tpu_custom_call.1} parent=0
    #allocation2 [shape = 'u8[4096]{0}', space=vmem, size = 0x1000, scoped, tag = 'input window, operand 0, single buffered']
    #allocation3 [shape = 's32[1]{0}', space=sflag, size = 0x4, scoped, tag = 'scoped memory for tpu_custom_call.1']
    #allocation4 [shape = 's32[1]{0}', space=sflag, size = 0x4, scoped, tag = 'scoped memory for tpu_custom_call.1']
    #allocation5 [shape = 'u8[16384]{0}', space=vmem, size = 0x4000, scoped, tag = 'input window, operand 1, single buffered']
    #allocation6 [shape = 's32[1]{0}', space=sflag, size = 0x4, scoped, tag = 'scoped memory for tpu_custom_call.1']
    #allocation7 [shape = 'u8[16384]{0}', space=vmem, size = 0x4000, scoped, tag = 'input window, operand 3, single buffered']
    #allocation8 [shape = 'u8[4096]{0}', space=vmem, size = 0x1000, scoped, tag = 'output window, operand 0, single buffered']
    %10 = vsyncpa [#allocation3], 0
    %11 = vsyncpa [#allocation6], 0
    %12 = vsyncpa [#allocation4], 0
    // Predicated region
    $region2: #{tpu_custom_call.1} parent=1 // pred_check
      _
    $region3: #{tpu_custom_call.1} parent=1 // pred_check_branch
      %14 = sbr.rel (0) target = $region5
    $region4: #{tpu_custom_call.1} parent=1 // pred_region
      %16 = vsyncadd [#allocation3], 0
      %s18 = sshll.u32 %s0, 4
      %s19 = int_to_ptr.hbm [resolvable:$true] %s18
      %s20 = sshll.u32 [#allocation2], 4
      %s21 = int_to_ptr.vmem [resolvable:$true] %s20
      %23 = dma.hbm_to_vmem [thread:$0]  %s19, 128, %s21, [#allocation3]
    $region5: #{tpu_custom_call.1} parent=1 // pred_fallthru
      _
    // Predicated region
    $region6: #{tpu_custom_call.1} parent=1 // pred_check
      _
    $region7: #{tpu_custom_call.1} parent=1 // pred_check_branch
      %25 = sbr.rel (0) target = $region9
    $region8: #{tpu_custom_call.1} parent=1 // pred_region
      %27 = vsyncadd [#allocation6], 0
      %s28 = sshll.u32 %s1, 4
      %s29 = int_to_ptr.hbm [resolvable:$true] %s28
      %s30 = sshll.u32 [#allocation5], 4
      %s31 = int_to_ptr.vmem [resolvable:$true] %s30
      %36 = dma.hbm_to_vmem [thread:$0]  %s29, 512, %s31, [#allocation6], 128, 128, 8
    $region9: #{tpu_custom_call.1} parent=1 // pred_fallthru
      _
    // Predicated region
    $region10: #{tpu_custom_call.1} parent=1 // pred_check
      _
    $region11: #{tpu_custom_call.1} parent=1 // pred_check_branch
      %38 = sbr.rel (0) target = $region13
    $region12: #{tpu_custom_call.1} parent=1 // pred_region
      _
    $region13: #{tpu_custom_call.1} parent=1 // pred_fallthru
      _
    // Predicated region
    $region14: #{tpu_custom_call.1} parent=1 // pred_check
      _
    $region15: #{tpu_custom_call.1} parent=1 // pred_check_branch
      %40 = sbr.rel (0) target = $region17
    $region16: #{tpu_custom_call.1} parent=1 // pred_region
      %42 = vsyncadd [#allocation6], 0
      %s43 = sshll.u32 %s3, 4
      %s44 = int_to_ptr.hbm [resolvable:$true] %s43
      %s45 = sshll.u32 [#allocation7], 4
      %s46 = int_to_ptr.vmem [resolvable:$true] %s45
      %51 = dma.hbm_to_vmem [thread:$0]  %s44, 512, %s46, [#allocation6], 128, 128, 8
    $region17: #{tpu_custom_call.1} parent=1 // pred_fallthru
      _
    // Predicated region
    $region18: #{tpu_custom_call.1} parent=1 // pred_check
      _
    $region19: #{tpu_custom_call.1} parent=1 // pred_check_branch
      %53 = sbr.rel (0) target = $region21
    $region20: #{tpu_custom_call.1} parent=1 // pred_region
      _
    $region21: #{tpu_custom_call.1} parent=1 // pred_fallthru
      _
    // Predicated region
    $region22: #{tpu_custom_call.1} parent=1 // pred_check
      _
    $region23: #{tpu_custom_call.1} parent=1 // pred_check_branch
      %55 = sbr.rel (0) target = $region25
    $region24: #{tpu_custom_call.1} parent=1 // pred_region
      %57 = dma.done [#allocation3], 128
    $region25: #{tpu_custom_call.1} parent=1 // pred_fallthru
      _
    // Predicated region
    $region26: #{tpu_custom_call.1} parent=1 // pred_check
      _
    $region27: #{tpu_custom_call.1} parent=1 // pred_check_branch
      %59 = sbr.rel (0) target = $region29
    $region28: #{tpu_custom_call.1} parent=1 // pred_region
      %61 = dma.done [#allocation6], 512
    $region29: #{tpu_custom_call.1} parent=1 // pred_fallthru
      _
    // Predicated region
    $region30: #{tpu_custom_call.1} parent=1 // pred_check
      _
    $region31: #{tpu_custom_call.1} parent=1 // pred_check_branch
      %63 = sbr.rel (0) target = $region33
    $region32: #{tpu_custom_call.1} parent=1 // pred_region
      %65 = dma.done [#allocation6], 512
    $region33: #{tpu_custom_call.1} parent=1 // pred_fallthru
      _
    %v66 = vld [vmem:[#allocation5] sm:$0xff]
    %v67 = vld [vmem:[#allocation5 + $0x8] sm:$0xff]
    %v68 = vld [vmem:[#allocation5 + $0x10] sm:$0xff]
    %v69 = vld [vmem:[#allocation5 + $0x18] sm:$0xff]
    %v70 = vld [vmem:[#allocation2] sm:$0xff]
    %v71 = vld [vmem:[%s2] sm:$0x1]
    %v73 = vperm.slane %v71, 0
    %vm75 = vcmask 261120
    %v77 = vsel %vm75, %v70, 0
    %79 = vmatpush.msra.mxu0 0.0
    %80 = vmatpush.msra.mxu0 0.0
    %81 = vmatpush.msra.mxu0 0.0
    %82 = vmatpush.msra.mxu0 0.0
    %83 = vmatpush.msra.mxu0 0.0
    %84 = vmatpush.msra.mxu0 0.0
    %85 = vmatpush.msra.mxu0 0.0
    %86 = vmatpush.msra.mxu0 0.0
    %87 = vmatpush.msra.mxu0 0.0
    %88 = vmatpush.msra.mxu0 0.0
    %89 = vmatpush.msra.mxu0 0.0
    %90 = vmatpush.msra.mxu0 0.0
    %91 = vmatpush.msra.mxu0 %v69
    %92 = vmatpush.msra.mxu0 %v68
    %93 = vmatpush.msra.mxu0 %v67
    %94 = vmatpush.msra.mxu0 %v66
    %95 = vmatmul.f32.gmra.mxu0 %v77
    %v96 = vpop.f32.mrf.mxu0
    %v97 = vadd.f32 %v73, %v96
    %98 = vdwg.mxu0
    %v99 = vmax.f32 %v97, 0.0
    %v100 = vld [vmem:[#allocation7] sm:$0xff]
    %v101 = vld [vmem:[#allocation7 + $0x8] sm:$0xff]
    %v102 = vld [vmem:[#allocation7 + $0x10] sm:$0xff]
    %v103 = vld [vmem:[#allocation7 + $0x18] sm:$0xff]
    %v104 = vld [vmem:[%s4] sm:$0x1]
    %v106 = vperm.slane %v104, 0
    %v109 = vsel %vm75, %v99, 0
    %111 = vmatpush.msra.mxu0 0.0
    %112 = vmatpush.msra.mxu0 0.0
    %113 = vmatpush.msra.mxu0 0.0
    %114 = vmatpush.msra.mxu0 0.0
    %115 = vmatpush.msra.mxu0 0.0
    %116 = vmatpush.msra.mxu0 0.0
    %117 = vmatpush.msra.mxu0 0.0
    %118 = vmatpush.msra.mxu0 0.0
    %119 = vmatpush.msra.mxu0 0.0
    %120 = vmatpush.msra.mxu0 0.0
    %121 = vmatpush.msra.mxu0 0.0
    %122 = vmatpush.msra.mxu0 0.0
    %123 = vmatpush.msra.mxu0 %v103
    %124 = vmatpush.msra.mxu0 %v102
    %125 = vmatpush.msra.mxu0 %v101
    %126 = vmatpush.msra.mxu0 %v100
    %127 = vmatmul.f32.gmra.mxu0 %v109
    %v128 = vpop.f32.mrf.mxu0
    %v129 = vadd.f32 %v106, %v128
    %130 = vdwg.mxu0
    %v131 = vmax.f32 %v129, 0.0
    %132 = vst.msk [vmem:[#allocation8] sm:$0xff] %vm75, %v131
    // Predicated region
    $region34: #{tpu_custom_call.1} parent=1 // pred_check
      _
    $region35: #{tpu_custom_call.1} parent=1 // pred_check_branch
      %134 = sbr.rel (0) target = $region37
    $region36: #{tpu_custom_call.1} parent=1 // pred_region
      %136 = vsyncadd [#allocation4], 0
      %s138 = sshll.u32 [#allocation8], 4
      %s139 = int_to_ptr.vmem [resolvable:$true] %s138
      %s140 = sshll.u32 %s5, 4
      %s141 = int_to_ptr.hbm [resolvable:$true] %s140
      %143 = dma.vmem_to_hbm [thread:$0]  %s139, 128, %s141, [#allocation4]
    $region37: #{tpu_custom_call.1} parent=1 // pred_fallthru
      _
    // Predicated region
    $region38: #{tpu_custom_call.1} parent=1 // pred_check
      _
    $region39: #{tpu_custom_call.1} parent=1 // pred_check_branch
      %145 = sbr.rel (0) target = $region41
    $region40: #{tpu_custom_call.1} parent=1 // pred_region
      %147 = dma.done [#allocation4], 128
    $region41: #{tpu_custom_call.1} parent=1 // pred_fallthru
      _
    %148 = vsyncpa [#allocation3], 1
    %149 = vsyncpa [#allocation6], 1
    %150 = vsyncpa [#allocation4], 1

</llo_original>
